<compile_context>
chip_gen: v6e
topology: v6e:2x2x1
jax: 0.10.0
libtpu: 0.0.40
codegen_flags: <defaults>
</compile_context>

<pallas_src>
import jax
import jax.numpy as jnp
from jax.experimental import pallas as pl
from jax.experimental.pallas import tpu as pltpu


def _round_up(a, b):
    return ((a + b - 1) // b) * b


def _vmem_budget():
    """Per-generation VMEM budget (bytes) for tile sizing + vmem_limit_bytes."""
    cap = None
    try:
        cap = getattr(pltpu.get_tpu_info(), "vmem_capacity_bytes", None)
    except Exception:
        cap = None
    if not cap:
        cap = 64 * 1024 * 1024          # conservative fallback: v7x per-TC VMEM
    # 3/4 of physical, capped at 100 MiB: ~48 MiB on v7x, 96 MiB on v5e/v6e.
    return int(min((cap * 3) // 4, 100 * 1024 * 1024))


def _pick_tiles(n, f_out_pad, adj_itemsize, tm_max, tk_max, budget):
    """Choose (tm, tk, xw_resident) so the working set fits the VMEM budget."""
    tm = max(32, (min(tm_max, _round_up(n, 32)) // 32) * 32)      # 8-bit adj => 32-row packing
    tk = max(128, (min(tk_max, _round_up(n, 128)) // 128) * 128)  # lane-dim multiple of 128
    while True:
        n_cols = _round_up(n, tk)
        xw_full = n_cols * f_out_pad * 2                          # bf16 xw slab
        resident = 2 * xw_full <= budget // 2                     # leave half for adj/out
        ws = (2 * tm * tk * adj_itemsize                          # adj tile, double buffered
              + 2 * tm * f_out_pad * 4                            # resident output block
              + (2 * xw_full if resident else 2 * tk * f_out_pad * 2))
        if ws <= budget or (tm <= 32 and tk <= 128):
            return tm, tk, resident
        if tk > 128:
            tk = max(128, (tk // 2 // 128) * 128)
        else:
            tm = max(32, (tm // 2 // 32) * 32)


# ---------------------------------------------------------------------------
# Kernel 1: xw = x @ W^T   (tiny pre-matmul, tiled over rows, lane-dense out)
# ---------------------------------------------------------------------------
def _xw_kernel(x_ref, w_ref, o_ref):
    o_ref[...] = jnp.dot(
        x_ref[...], w_ref[...], preferred_element_type=jnp.float32
    ).astype(o_ref.dtype)


# ---------------------------------------------------------------------------
# Kernel 2: out = relu(adj @ xw)   ((rows, k) grid, accumulate into o_ref)
# ---------------------------------------------------------------------------
def _make_graphconv_kernel(tk, xw_resident):
    def kernel(adj_ref, xw_ref, o_ref):
        k = pl.program_id(1)

        @pl.when(k == 0)
        def _():
            o_ref[...] = jnp.zeros_like(o_ref)

        if xw_resident:
            # Whole xw lives in VMEM (fetched once); slice the current k chunk.
            start = pl.multiple_of(k * tk, tk)
            xw_tile = xw_ref[pl.ds(start, tk), :]
        else:
            xw_tile = xw_ref[...]

        # adj stored as int8/bf16 in HBM; upcast per-tile (VPU) -> bf16 MXU.
        o_ref[...] += jnp.dot(
            adj_ref[...].astype(jnp.bfloat16), xw_tile,
            preferred_element_type=jnp.float32)

        @pl.when(k == pl.num_programs(1) - 1)
        def _():
            o_ref[...] = jnp.maximum(o_ref[...], 0.0)

    return kernel


def graph_conv(x, adj, weight_t, *, tm_max=1024, tk_max=4096,
               adj_storage_dtype=None):
    """x: (N, F_in), adj: (N, N), weight_t: (F_in, F_out) -> (N, F_out) f32."""
    N, f_in = x.shape
    assert adj.shape == (N, N)
    f_out = weight_t.shape[1]

    # Lane-dense output width; above 128 pad to a multiple of 256 (v6e/v7x MXU).
    f_out_pad = 128 if f_out <= 128 else _round_up(f_out, 256)

    # adj storage dtype: honour a pre-cast int8/uint8/bf16 adjacency (no
    # wrapper HBM pass); otherwise round once to bf16 (exact for {0,1}).
    if adj_storage_dtype is None:
        adj_storage_dtype = (adj.dtype if adj.dtype in
                             (jnp.int8, jnp.uint8, jnp.bfloat16) else jnp.bfloat16)
    if adj.dtype != adj_storage_dtype:
        adj = adj.astype(adj_storage_dtype)
    adj_itemsize = adj.dtype.itemsize

    budget = _vmem_budget()
    tm, tk, xw_resident = _pick_tiles(N, f_out_pad, adj_itemsize,
                                      tm_max, tk_max, budget)
    n_rows = _round_up(N, tm)
    n_cols = _round_up(N, tk)

    # ---- adj prep: skipped entirely when already tile-aligned --------------
    if (n_rows, n_cols) != (N, N):
        adj = jnp.zeros((n_rows, n_cols), adj.dtype).at[:N, :N].set(adj)

    # x / W are tiny; pad once (zero padding is mathematically inert).
    x_p = x.astype(jnp.float32)
    if n_cols != N:
        x_p = jnp.zeros((n_cols, f_in), jnp.float32).at[:N, :].set(x_p)
    w_p = weight_t.astype(jnp.float32)
    if f_out_pad != f_out:
        w_p = jnp.zeros((f_in, f_out_pad), jnp.float32).at[:, :f_out].set(w_p)

    # ---- xw = x @ W^T (cheap, keeps the whole forward inside Pallas) -------
    xw = pl.pallas_call(
        _xw_kernel,
        out_shape=jax.ShapeDtypeStruct((n_cols, f_out_pad), jnp.bfloat16),
        grid_spec=pltpu.PrefetchScalarGridSpec(
            num_scalar_prefetch=0,
            grid=(n_cols // tk,),
            in_specs=[
                pl.BlockSpec((tk, f_in), lambda i: (i, 0)),         # x rows
                pl.BlockSpec((f_in, f_out_pad), lambda i: (0, 0)),  # W^T (padded)
            ],
            out_specs=pl.BlockSpec((tk, f_out_pad), lambda i: (i, 0)),
        ),
        compiler_params=pltpu.CompilerParams(
            dimension_semantics=("parallel",)),
    )(x_p, w_p)

    # ---- out = relu(adj @ xw): stream adj tiles, accumulate into o_ref -----
    if xw_resident:
        xw_spec = pl.BlockSpec((n_cols, f_out_pad), lambda i, k: (0, 0))
    else:
        xw_spec = pl.BlockSpec((tk, f_out_pad), lambda i, k: (k, 0))

    out_p = pl.pallas_call(
        _make_graphconv_kernel(tk, xw_resident),
        out_shape=jax.ShapeDtypeStruct((n_rows, f_out_pad), jnp.float32),
        grid_spec=pltpu.PrefetchScalarGridSpec(
            num_scalar_prefetch=0,
            grid=(n_rows // tm, n_cols // tk),
            in_specs=[
                pl.BlockSpec((tm, tk), lambda i, k: (i, k)),   # adj tile
                xw_spec,                                       # xw (resident or slab)
            ],
            out_specs=pl.BlockSpec((tm, f_out_pad), lambda i, k: (i, 0)),
        ),
        compiler_params=pltpu.CompilerParams(
            dimension_semantics=("parallel", "arbitrary"),
            vmem_limit_bytes=budget,
        ),
    )(adj, xw)

    # Strip the row / feature padding.
    return out_p[:N, :f_out]


if __name__ == "__main__":
    key = jax.random.PRNGKey(0)

    def make_inputs(k, n, in_feats, out_feats, density=0.3):
        k_x, k_adj, k_w = jax.random.split(k, 3)
        x = jax.random.normal(k_x, (n, in_feats), dtype=jnp.float32)
        a = (jax.random.uniform(k_adj, (n, n)) < density).astype(jnp.float32)
        adj = jnp.clip(a + a.T + jnp.eye(n, dtype=jnp.float32), 0.0, 1.0)
        # nn.Linear(in_feats, out_feats, bias=False): weight (out, in), U(+-1/sqrt(in)).
        bound = 1.0 / jnp.sqrt(jnp.float32(in_feats))
        w = jax.random.uniform(k_w, (out_feats, in_feats),
                               minval=-bound, maxval=bound, dtype=jnp.float32)
        return x, adj, w.T

    def reference(x, adj, weight_t):
        return jnp.maximum((adj @ x) @ weight_t, 0.0)

    k1, k2 = jax.random.split(key)

    # Test 1: module-sized small case (single row tile, single k step,
    # pad + bf16-cast wrapper path).
    x1, adj1, wt1 = make_inputs(k1, n=16, in_feats=8, out_feats=32)
    out1 = jax.block_until_ready(graph_conv(x1, adj1, wt1))
    ref1 = reference(x1, adj1, wt1)
    assert out1.shape == (16, 32)
    assert jnp.allclose(out1, ref1, atol=2e-1, rtol=5e-2), (
        float(jnp.max(jnp.abs(out1 - ref1))))

    # Test 2: tile-aligned N with a pre-cast int8 adjacency -> zero-prep fast
    # path, several row tiles and k steps (exercises accumulation, the last-k
    # ReLU gate, the resident-xw slicing and the int8 -> bf16 upcast).
    x2, adj2, wt2 = make_inputs(k2, n=384, in_feats=8, out_feats=32)
    out2 = jax.block_until_ready(
        graph_conv(x2, adj2.astype(jnp.int8), wt2, tm_max=64, tk_max=128))
    ref2 = reference(x2, adj2, wt2)
    assert out2.shape == (384, 32)
    assert jnp.allclose(out2, ref2, atol=2e-1, rtol=5e-2), (
        float(jnp.max(jnp.abs(out2 - ref2))))

    print("KERNEL_OK")
</pallas_src>

<mosaic_0001>
module attributes {stable_mosaic.version = 11 : i64} {
  func.func @_xw_kernel(%arg0: i32, %arg1: memref<128x8xf32, #tpu.memory_space<vmem>>, %arg2: memref<8x128xf32, #tpu.memory_space<vmem>>, %arg3: memref<128x128xbf16, #tpu.memory_space<vmem>>) attributes {dimension_semantics = [#tpu.dimension_semantics<parallel>], iteration_bounds = array<i64: 1>, scalar_prefetch = 0 : i64, scratch_operands = 0 : i64, tpu.core_type = #tpu.core_type<tc>, window_params = [{transform_indices = @transform_0, window_bounds = array<i64: 128, 8>}, {pipeline_mode = #tpu.pipeline_mode<synchronous>, transform_indices = @transform_1, window_bounds = array<i64: 8, 128>}, {transform_indices = @transform_2, window_bounds = array<i64: 128, 128>}]} {
    %c0 = arith.constant 0 : index
    %c0_0 = arith.constant 0 : index
    %0 = vector.load %arg1[%c0, %c0_0] : memref<128x8xf32, #tpu.memory_space<vmem>>, vector<128x8xf32>
    %c0_1 = arith.constant 0 : index
    %c0_2 = arith.constant 0 : index
    %1 = vector.load %arg2[%c0_1, %c0_2] : memref<8x128xf32, #tpu.memory_space<vmem>>, vector<8x128xf32>
    %cst = arith.constant dense<0.000000e+00> : vector<128x128xf32>
    %2 = tpu.matmul %0, %1, %cst {dimension_numbers = #tpu.dot_dimension_numbers<[1], [0], [0], [1], [0, 0, 1, 1], [], []>} : vector<128x8xf32>, vector<8x128xf32>, vector<128x128xf32> -> vector<128x128xf32>
    %3 = arith.truncf %2 : vector<128x128xf32> to vector<128x128xbf16>
    %c0_3 = arith.constant 0 : index
    %c0_4 = arith.constant 0 : index
    %4 = vector.load %arg3[%c0_3, %c0_4] : memref<128x128xbf16, #tpu.memory_space<vmem>>, vector<128x128xbf16>
    tpu.vector_store %arg3[%c0_3, %c0_4], %3 {strides = array<i32>} : memref<128x128xbf16, #tpu.memory_space<vmem>>, vector<128x128xbf16>,
    return
  }
  func.func @transform_0(%arg0: i32) -> (i32, i32) {
    %c0_i32 = arith.constant 0 : i32
    %c0_i32_0 = arith.constant 0 : i32
    return %arg0, %c0_i32 : i32, i32
  }
  func.func @transform_1(%arg0: i32) -> (i32, i32) {
    %c0_i32 = arith.constant 0 : i32
    %c0_i32_0 = arith.constant 0 : i32
    %c0_i32_1 = arith.constant 0 : i32
    return %c0_i32, %c0_i32_0 : i32, i32
  }
  func.func @transform_2(%arg0: i32) -> (i32, i32) {
    %c0_i32 = arith.constant 0 : i32
    %c0_i32_0 = arith.constant 0 : i32
    return %arg0, %c0_i32 : i32, i32
  }
}

</mosaic_0001>

<llo_original>
// kernel: tpu_custom_call.1
$region0: #{tpu_custom_call.1}
  #allocation0 [shape = 'u32[]', space=smem, size = 0x4, offset = 0x4, fixed_abs, tag = 'smem constant byte address 0x4 - core index']
  #allocation1 [shape = 'u32[144,128]{1,0:T(1,128)}', space=vmem, size = 0x12000, scoped, tag = 'internal scratch']
  %s0 = inlined_call_operand.vmem [shape: f32[128,8], index: 0, kind: input, shape index: {}]
  %s1 = inlined_call_operand.vmem [shape: f32[8,128], index: 1, kind: input, shape index: {}]
  %s2 = inlined_call_operand.hbm [shape: bf16[128,128], index: 2, kind: output, shape index: {}]
  %s3 = sld [smem:[#allocation0]]
  $region18: #{tpu_custom_call.1} parent=0
    _
  %s5 = ssub.s32 1, %s3
  %s6 = scalar_select 0, %s5, %s3
  $region1: #{tpu_custom_call.1} parent=0
    #allocation2 [shape = 'u8[32768]{0}', space=vmem, size = 0x8000, scoped, tag = 'output window, operand 0, single buffered']
    #allocation3 [shape = 's32[1]{0}', space=sflag, size = 0x4, scoped, tag = 'scoped memory for tpu_custom_call.1']
    %7 = vsyncpa [#allocation3], 0
    // Predicated region
    $region2: #{tpu_custom_call.1} parent=1 // pred_check
      _
    $region3: #{tpu_custom_call.1} parent=1 // pred_check_branch
      %9 = sbr.rel (0) target = $region5
    $region4: #{tpu_custom_call.1} parent=1 // pred_region
      _
    $region5: #{tpu_custom_call.1} parent=1 // pred_fallthru
      _
    // Predicated region
    $region6: #{tpu_custom_call.1} parent=1 // pred_check
      _
    $region7: #{tpu_custom_call.1} parent=1 // pred_check_branch
      %11 = sbr.rel (0) target = $region9
    $region8: #{tpu_custom_call.1} parent=1 // pred_region
      _
    $region9: #{tpu_custom_call.1} parent=1 // pred_fallthru
      _
    %v12 = vld [vmem:[%s0] sm:$0xff]
    %v13 = vld [vmem:[%s0 + $0x8] sm:$0xff]
    %v14 = vld [vmem:[%s0 + $0x10] sm:$0xff]
    %v15 = vld [vmem:[%s0 + $0x18] sm:$0xff]
    %v16 = vld [vmem:[%s0 + $0x20] sm:$0xff]
    %v17 = vld [vmem:[%s0 + $0x28] sm:$0xff]
    %v18 = vld [vmem:[%s0 + $0x30] sm:$0xff]
    %v19 = vld [vmem:[%s0 + $0x38] sm:$0xff]
    %v20 = vld [vmem:[%s0 + $0x40] sm:$0xff]
    %v21 = vld [vmem:[%s0 + $0x48] sm:$0xff]
    %v22 = vld [vmem:[%s0 + $0x50] sm:$0xff]
    %v23 = vld [vmem:[%s0 + $0x58] sm:$0xff]
    %v24 = vld [vmem:[%s0 + $0x60] sm:$0xff]
    %v25 = vld [vmem:[%s0 + $0x68] sm:$0xff]
    %v26 = vld [vmem:[%s0 + $0x70] sm:$0xff]
    %v27 = vld [vmem:[%s0 + $0x78] sm:$0xff]
    %v28 = vld [vmem:[%s1] sm:$0xff]
    %vm29 = vcmask 64512
    %v31 = vsel %vm29, %v12, 0
    %v34 = vsel %vm29, %v13, 0
    %v37 = vsel %vm29, %v14, 0
    %v40 = vsel %vm29, %v15, 0
    %v43 = vsel %vm29, %v16, 0
    %v46 = vsel %vm29, %v17, 0
    %v49 = vsel %vm29, %v18, 0
    %v52 = vsel %vm29, %v19, 0
    %v55 = vsel %vm29, %v20, 0
    %v58 = vsel %vm29, %v21, 0
    %v61 = vsel %vm29, %v22, 0
    %v64 = vsel %vm29, %v23, 0
    %v67 = vsel %vm29, %v24, 0
    %v70 = vsel %vm29, %v25, 0
    %v73 = vsel %vm29, %v26, 0
    %v76 = vsel %vm29, %v27, 0
    %78 = vmatprep.subr.mxu0 0.0
    %79 = vmatpush1.msra.mxu0 0.0
    %80 = vmatprep.subr.mxu0 0.0
    %81 = vmatpush1.msra.mxu0 0.0
    %82 = vmatprep.subr.mxu0 0.0
    %83 = vmatpush1.msra.mxu0 0.0
    %84 = vmatprep.subr.mxu0 0.0
    %85 = vmatpush1.msra.mxu0 0.0
    %86 = vmatprep.subr.mxu0 0.0
    %87 = vmatpush1.msra.mxu0 0.0
    %88 = vmatprep.subr.mxu0 0.0
    %89 = vmatpush1.msra.mxu0 0.0
    %90 = vmatprep.subr.mxu0 0.0
    %91 = vmatpush1.msra.mxu0 0.0
    %92 = vmatprep.subr.mxu0 0.0
    %93 = vmatpush1.msra.mxu0 0.0
    %94 = vmatprep.subr.mxu0 0.0
    %95 = vmatpush1.msra.mxu0 0.0
    %96 = vmatprep.subr.mxu0 0.0
    %97 = vmatpush1.msra.mxu0 0.0
    %98 = vmatprep.subr.mxu0 0.0
    %99 = vmatpush1.msra.mxu0 0.0
    %100 = vmatprep.subr.mxu0 0.0
    %101 = vmatpush1.msra.mxu0 0.0
    %102 = vmatprep.subr.mxu0 0.0
    %103 = vmatpush1.msra.mxu0 0.0
    %104 = vmatprep.subr.mxu0 0.0
    %105 = vmatpush1.msra.mxu0 0.0
    %106 = vmatprep.subr.mxu0 0.0
    %107 = vmatpush1.msra.mxu0 0.0
    %108 = vmatprep.subr.mxu0 0.0
    %109 = vmatpush1.msra.mxu0 %v28
    %110 = vmatprep.subr.mxu0 0.0
    %111 = vmatpush2.msra.mxu0 0.0
    %112 = vmatprep.subr.mxu0 0.0
    %113 = vmatpush2.msra.mxu0 0.0
    %114 = vmatprep.subr.mxu0 0.0
    %115 = vmatpush2.msra.mxu0 0.0
    %116 = vmatprep.subr.mxu0 0.0
    %117 = vmatpush2.msra.mxu0 0.0
    %118 = vmatprep.subr.mxu0 0.0
    %119 = vmatpush2.msra.mxu0 0.0
    %120 = vmatprep.subr.mxu0 0.0
    %121 = vmatpush2.msra.mxu0 0.0
    %122 = vmatprep.subr.mxu0 0.0
    %123 = vmatpush2.msra.mxu0 0.0
    %124 = vmatprep.subr.mxu0 0.0
    %125 = vmatpush2.msra.mxu0 0.0
    %126 = vmatprep.subr.mxu0 0.0
    %127 = vmatpush2.msra.mxu0 0.0
    %128 = vmatprep.subr.mxu0 0.0
    %129 = vmatpush2.msra.mxu0 0.0
    %130 = vmatprep.subr.mxu0 0.0
    %131 = vmatpush2.msra.mxu0 0.0
    %132 = vmatprep.subr.mxu0 0.0
    %133 = vmatpush2.msra.mxu0 0.0
    %134 = vmatprep.subr.mxu0 0.0
    %135 = vmatpush2.msra.mxu0 0.0
    %136 = vmatprep.subr.mxu0 0.0
    %137 = vmatpush2.msra.mxu0 0.0
    %138 = vmatprep.subr.mxu0 0.0
    %139 = vmatpush2.msra.mxu0 0.0
    %140 = vmatprep.subr.mxu0 0.0
    %141 = vmatpush2.msra.mxu0 0.0
    %142 = vmatprep.mubr.f32.mxu0 0.0
    %143 = vmatmul.mubr.f32.gmra.mxu0 %v31
    %v144 = vpop.f32.mrf.mxu0
    %v145 = vadd.f32 0.0, %v144
    %v146 = vpop.f32.mrf.mxu0
    %147 = vmatprep.mubr.f32.mxu0 0.0
    %148 = vmatmul.mubr.f32.gmra.mxu0 %v34
    %v149 = vpop.f32.mrf.mxu0
    %v150 = vadd.f32 0.0, %v149
    %v151 = vpop.f32.mrf.mxu0
    %152 = vmatprep.mubr.f32.mxu0 0.0
    %153 = vmatmul.mubr.f32.gmra.mxu0 %v37
    %v154 = vpop.f32.mrf.mxu0
    %v155 = vadd.f32 0.0, %v154
    %v156 = vpop.f32.mrf.mxu0
    %157 = vmatprep.mubr.f32.mxu0 0.0
    %158 = vmatmul.mubr.f32.gmra.mxu0 %v40
    %v159 = vpop.f32.mrf.mxu0
    %v160 = vadd.f32 0.0, %v159
    %v161 = vpop.f32.mrf.mxu0
    %162 = vmatprep.mubr.f32.mxu0 0.0
    %163 = vmatmul.mubr.f32.gmra.mxu0 %v43
    %v164 = vpop.f32.mrf.mxu0
    %v165 = vadd.f32 0.0, %v164
    %v166 = vpop.f32.mrf.mxu0
    %167 = vmatprep.mubr.f32.mxu0 0.0
    %168 = vmatmul.mubr.f32.gmra.mxu0 %v46
    %v169 = vpop.f32.mrf.mxu0
    %v170 = vadd.f32 0.0, %v169
    %v171 = vpop.f32.mrf.mxu0
    %172 = vmatprep.mubr.f32.mxu0 0.0
    %173 = vmatmul.mubr.f32.gmra.mxu0 %v49
    %v174 = vpop.f32.mrf.mxu0
    %v175 = vadd.f32 0.0, %v174
    %v176 = vpop.f32.mrf.mxu0
    %177 = vmatprep.mubr.f32.mxu0 0.0
    %178 = vmatmul.mubr.f32.gmra.mxu0 %v52
    %v179 = vpop.f32.mrf.mxu0
    %v180 = vadd.f32 0.0, %v179
    %v181 = vpop.f32.mrf.mxu0
    %182 = vmatprep.mubr.f32.mxu0 0.0
    %183 = vmatmul.mubr.f32.gmra.mxu0 %v55
    %v184 = vpop.f32.mrf.mxu0
    %v185 = vadd.f32 0.0, %v184
    %v186 = vpop.f32.mrf.mxu0
    %187 = vmatprep.mubr.f32.mxu0 0.0
    %188 = vmatmul.mubr.f32.gmra.mxu0 %v58
    %v189 = vpop.f32.mrf.mxu0
    %v190 = vadd.f32 0.0, %v189
    %v191 = vpop.f32.mrf.mxu0
    %192 = vmatprep.mubr.f32.mxu0 0.0
    %193 = vmatmul.mubr.f32.gmra.mxu0 %v61
    %v194 = vpop.f32.mrf.mxu0
    %v195 = vadd.f32 0.0, %v194
    %v196 = vpop.f32.mrf.mxu0
    %197 = vmatprep.mubr.f32.mxu0 0.0
    %198 = vmatmul.mubr.f32.gmra.mxu0 %v64
    %v199 = vpop.f32.mrf.mxu0
    %v200 = vadd.f32 0.0, %v199
    %v201 = vpop.f32.mrf.mxu0
    %202 = vmatprep.mubr.f32.mxu0 0.0
    %203 = vmatmul.mubr.f32.gmra.mxu0 %v67
    %v204 = vpop.f32.mrf.mxu0
    %v205 = vadd.f32 0.0, %v204
    %v206 = vpop.f32.mrf.mxu0
    %207 = vmatprep.mubr.f32.mxu0 0.0
    %208 = vmatmul.mubr.f32.gmra.mxu0 %v70
    %v209 = vpop.f32.mrf.mxu0
    %v210 = vadd.f32 0.0, %v209
    %v211 = vpop.f32.mrf.mxu0
    %212 = vmatprep.mubr.f32.mxu0 0.0
    %213 = vmatmul.mubr.f32.gmra.mxu0 %v73
    %v214 = vpop.f32.mrf.mxu0
    %v215 = vadd.f32 0.0, %v214
    %v216 = vpop.f32.mrf.mxu0
    %217 = vmatprep.mubr.f32.mxu0 0.0
    %218 = vmatmul.mubr.f32.gmra.mxu0 %v76
    %v219 = vpop.f32.mrf.mxu0
    %v220 = vadd.f32 0.0, %v219
    %v221 = vpop.f32.mrf.mxu0
    %222 = vdwg.mxu0
    %v223 = vpack.c.bf16 %v150, %v145
    %v224 = vpack.c.bf16 %v160, %v155
    %v225 = vpack.c.bf16 %v170, %v165
    %v226 = vpack.c.bf16 %v180, %v175
    %v227 = vpack.c.bf16 %v190, %v185
    %v228 = vpack.c.bf16 %v200, %v195
    %v229 = vpack.c.bf16 %v210, %v205
    %v230 = vpack.c.bf16 %v220, %v215
    %v239 = vunpack.c.l.b16 %v223
    %v240 = vunpack.c.h.b16 %v223
    %v241 = vunpack.c.l.b16 %v224
    %v242 = vunpack.c.h.b16 %v224
    %v243 = vunpack.c.l.b16 %v225
    %v244 = vunpack.c.h.b16 %v225
    %v245 = vunpack.c.l.b16 %v226
    %v246 = vunpack.c.h.b16 %v226
    %v247 = vunpack.c.l.b16 %v227
    %v248 = vunpack.c.h.b16 %v227
    %v249 = vunpack.c.l.b16 %v228
    %v250 = vunpack.c.h.b16 %v228
    %v251 = vunpack.c.l.b16 %v229
    %v252 = vunpack.c.h.b16 %v229
    %v253 = vunpack.c.l.b16 %v230
    %v254 = vunpack.c.h.b16 %v230
    %v255 = vpack.c.b16 %v239, %v239
    %v256 = vpack.c.b16 %v240, %v240
    %v257 = vpack.c.b16 %v241, %v241
    %v258 = vpack.c.b16 %v242, %v242
    %v259 = vpack.c.b16 %v243, %v243
    %v260 = vpack.c.b16 %v244, %v244
    %v261 = vpack.c.b16 %v245, %v245
    %v262 = vpack.c.b16 %v246, %v246
    %v263 = vpack.c.b16 %v247, %v247
    %v264 = vpack.c.b16 %v248, %v248
    %v265 = vpack.c.b16 %v249, %v249
    %v266 = vpack.c.b16 %v250, %v250
    %v267 = vpack.c.b16 %v251, %v251
    %v268 = vpack.c.b16 %v252, %v252
    %v269 = vpack.c.b16 %v253, %v253
    %v270 = vpack.c.b16 %v254, %v254
    %287 = vst [vmem:[#allocation2] sm:$0xf] %v255
    %288 = vst [vmem:[#allocation2 + $0x4] sm:$0xf] %v256
    %289 = vst [vmem:[#allocation2 + $0x8] sm:$0xf] %v257
    %290 = vst [vmem:[#allocation2 + $0xc] sm:$0xf] %v258
    %291 = vst [vmem:[#allocation2 + $0x10] sm:$0xf] %v259
    %292 = vst [vmem:[#allocation2 + $0x14] sm:$0xf] %v260
    %293 = vst [vmem:[#allocation2 + $0x18] sm:$0xf] %v261
    %294 = vst [vmem:[#allocation2 + $0x1c] sm:$0xf] %v262
    %295 = vst [vmem:[#allocation2 + $0x20] sm:$0xf] %v263
    %296 = vst [vmem:[#allocation2 + $0x24] sm:$0xf] %v264
    %297 = vst [vmem:[#allocation2 + $0x28] sm:$0xf] %v265
    %298 = vst [vmem:[#allocation2 + $0x2c] sm:$0xf] %v266
    %299 = vst [vmem:[#allocation2 + $0x30] sm:$0xf] %v267
    %300 = vst [vmem:[#allocation2 + $0x34] sm:$0xf] %v268
    %301 = vst [vmem:[#allocation2 + $0x38] sm:$0xf] %v269
    %302 = vst [vmem:[#allocation2 + $0x3c] sm:$0xf] %v270
    // Predicated region
    $region10: #{tpu_custom_call.1} parent=1 // pred_check
      _
    $region11: #{tpu_custom_call.1} parent=1 // pred_check_branch
      %304 = sbr.rel (0) target = $region13
    $region12: #{tpu_custom_call.1} parent=1 // pred_region
      %s306 = ssub.s32 1024, 1024
      %307 = vsyncadd [#allocation3], %s306
      %s308 = sshll.u32 [#allocation2], 4
      %s309 = int_to_ptr.vmem [resolvable:$true] %s308
      %314 = dma.vmem_to_hbm [thread:$0]  %s309, 1024, %s2, [#allocation3], 64, 64, 4
    $region13: #{tpu_custom_call.1} parent=1 // pred_fallthru
      _
    // Predicated region
    $region14: #{tpu_custom_call.1} parent=1 // pred_check
      _
    $region15: #{tpu_custom_call.1} parent=1 // pred_check_branch
      %316 = sbr.rel (0) target = $region17
    $region16: #{tpu_custom_call.1} parent=1 // pred_region
      %317 = dma.done [#allocation3], 1024
    $region17: #{tpu_custom_call.1} parent=1 // pred_fallthru
      _
    %318 = vsyncpa [#allocation3], 1

</llo_original>
